<compile_context>
chip_gen: v5e
topology: v5e:2x2
jax: 0.10.0
libtpu: 0.0.40
codegen_flags: <defaults>
</compile_context>

<pallas_src>
import functools

import jax
import jax.numpy as jnp
from jax.experimental import pallas as pl
from jax.experimental.pallas import tpu as pltpu

LANE = 128


def _round_up(x, m):
    return (x + m - 1) // m * m


# ---------------------------------------------------------------------------
# Kernel 1 (tiny, one-shot): synthesize the lane-dense Gaussian weight matrix
#   output: (KKP, COP) f32, row kk=(kh*K+kw)*Cin+ci, col co; padding zeroed.
# ---------------------------------------------------------------------------
def _gauss_weight_kernel(sigma_ref, beta_ref, dx2_ref, dy2_ref, o_ref, *, kk, cout):
    sig = 0.1 + jax.nn.sigmoid(sigma_ref[...]) * 0.5          # (1, COP)
    bet = 1.0 + beta_ref[...] * 0.3                           # (1, COP)
    inv2s2 = 0.5 / (sig * sig)                                # 1/(2*sigma^2)
    # y_sigma = sigma / beta  =>  dy^2/(2*y_sigma^2) = dy^2 * beta^2 / (2*sigma^2)
    w = jnp.exp(-dx2_ref[...] * inv2s2
                - dy2_ref[...] * (bet * bet) * inv2s2) * 0.03  # (KKP, COP)
    rows = jax.lax.broadcasted_iota(jnp.int32, w.shape, 0)
    cols = jax.lax.broadcasted_iota(jnp.int32, w.shape, 1)
    o_ref[...] = jnp.where((rows < kk) & (cols < cout), w, 0.0)


# ---------------------------------------------------------------------------
# Kernel 2: tiled conv matmul  (row-block of im2col patches) @ (KKP, COP)
# ---------------------------------------------------------------------------
def _conv_matmul_kernel(p_ref, w_ref, o_ref):
    o_ref[...] = jnp.dot(p_ref[...], w_ref[...],
                         preferred_element_type=jnp.float32)


# ---------------------------------------------------------------------------
# my_Conv2d forward
# ---------------------------------------------------------------------------
def my_conv2d_forward(x, sigma_param, beta_param, kernel_size=3, stride=1,
                      padding=0, row_block=256):
    n, cin, _, _ = x.shape
    cout = sigma_param.shape[0]
    k = kernel_size

    # NCHW -> NHWC once at the module boundary (channels on lanes for matmul).
    x = jnp.transpose(x, (0, 2, 3, 1))
    if padding:
        x = jnp.pad(x, ((0, 0), (padding, padding), (padding, padding), (0, 0)))
    hp, wp = x.shape[1], x.shape[2]
    oh = (hp - k) // stride + 1
    ow = (wp - k) // stride + 1

    kk = cin * k * k
    kkp = _round_up(kk, LANE)      # pad contraction dim -> lane-dense loads, MXU K fill
    cop = _round_up(cout, LANE)    # pad output channels -> lane-dense stores

    # per-column squared offsets (column order kk = (kh*K + kw)*Cin + ci)
    offs = jnp.arange(k, dtype=jnp.float32) - (k // 2)
    dx = jnp.repeat(offs, k * cin)            # varies with kh
    dy = jnp.tile(jnp.repeat(offs, cin), k)   # varies with kw
    dx2 = jnp.pad(dx * dx, (0, kkp - kk)).reshape(kkp, 1)
    dy2 = jnp.pad(dy * dy, (0, kkp - kk)).reshape(kkp, 1)
    sig2d = jnp.pad(sigma_param.astype(jnp.float32), (0, cop - cout)).reshape(1, cop)
    bet2d = jnp.pad(beta_param.astype(jnp.float32), (0, cop - cout)).reshape(1, cop)

    # --- Kernel 1: weight synthesis (hoisted out of the matmul grid) ---------
    w_mat = pl.pallas_call(
        functools.partial(_gauss_weight_kernel, kk=kk, cout=cout),
        out_shape=jax.ShapeDtypeStruct((kkp, cop), jnp.float32),
        grid=(1,),
        in_specs=[pl.BlockSpec((1, cop), lambda i: (0, 0)),
                  pl.BlockSpec((1, cop), lambda i: (0, 0)),
                  pl.BlockSpec((kkp, 1), lambda i: (0, 0)),
                  pl.BlockSpec((kkp, 1), lambda i: (0, 0))],
        out_specs=pl.BlockSpec((kkp, cop), lambda i: (0, 0)),
        compiler_params=pltpu.CompilerParams(dimension_semantics=("arbitrary",)),
    )(sig2d, bet2d, dx2, dy2)

    # --- im2col (host-side slicing glue), columns ordered (kh, kw, ci) -------
    cols = []
    for kh in range(k):
        for kw in range(k):
            cols.append(x[:, kh:kh + stride * (oh - 1) + 1:stride,
                             kw:kw + stride * (ow - 1) + 1:stride, :])
    patches = jnp.concatenate(cols, axis=3).reshape(n * oh * ow, kk)

    r = n * oh * ow
    tr = _round_up(min(row_block, _round_up(r, 8)), 8)   # row block (multiple of 8)
    rpad = _round_up(r, tr)
    patches = jnp.pad(patches, ((0, rpad - r), (0, kkp - kk)))

    # --- Kernel 2: tiled matmul, parallel over row blocks --------------------
    out2d = pl.pallas_call(
        _conv_matmul_kernel,
        out_shape=jax.ShapeDtypeStruct((rpad, cop), jnp.float32),
        grid=(rpad // tr,),
        in_specs=[pl.BlockSpec((tr, kkp), lambda i: (i, 0)),
                  pl.BlockSpec((kkp, cop), lambda i: (0, 0))],
        out_specs=pl.BlockSpec((tr, cop), lambda i: (i, 0)),
        compiler_params=pltpu.CompilerParams(dimension_semantics=("parallel",)),
    )(patches, w_mat)

    out = out2d[:r, :cout].reshape(n, oh, ow, cout)
    return jnp.transpose(out, (0, 3, 1, 2))   # back to NCHW (PyTorch convention)


def init_my_conv2d_params(key, channel_out):
    ks, kb = jax.random.split(key)
    return {
        "sigma": jax.random.normal(ks, (channel_out,), jnp.float32) * 0.5,
        "beta":  jax.random.normal(kb, (channel_out,), jnp.float32) * 0.01,
    }


if __name__ == "__main__":
    key = jax.random.PRNGKey(0)
    kx, kp = jax.random.split(key)

    N, CIN, H, W = 2, 4, 16, 16
    COUT, K = 8, 3

    x = jax.random.normal(kx, (N, CIN, H, W), jnp.float32)
    params = init_my_conv2d_params(kp, COUT)

    fwd = jax.jit(functools.partial(my_conv2d_forward,
                                    kernel_size=K, stride=1, padding=0))
    out = jax.block_until_ready(fwd(x, params["sigma"], params["beta"]))

    assert out.shape == (N, COUT, H - K + 1, W - K + 1)
    assert bool(jnp.all(jnp.isfinite(out)))

    # pure-JAX reference of my_Conv2d.forward (conv2d_kernel + F.conv2d)
    sigma = 0.1 + jax.nn.sigmoid(params["sigma"]) * 0.5
    beta = 1.0 + params["beta"] * 0.3
    y_sigma = sigma / beta
    offs = jnp.arange(K, dtype=jnp.float32) - (K // 2)
    gx2 = (offs.reshape(K, 1) ** 2)[None, None]          # varies along kh
    gy2 = (offs.reshape(1, K) ** 2)[None, None]          # varies along kw
    kern = jnp.exp(-gx2 / (2.0 * sigma[:, None, None, None] ** 2)
                   - gy2 / (2.0 * y_sigma[:, None, None, None] ** 2)) * 0.03
    kern = jnp.broadcast_to(kern, (COUT, CIN, K, K))
    ref = jax.lax.conv_general_dilated(
        x, kern, (1, 1), "VALID",
        dimension_numbers=("NCHW", "OIHW", "NCHW"),
        precision=jax.lax.Precision.HIGHEST)

    assert bool(jnp.allclose(out, ref, atol=2e-2, rtol=2e-2))
    print("KERNEL_OK")
</pallas_src>

<mosaic_0001>
module attributes {stable_mosaic.version = 11 : i64} {
  func.func @_gauss_weight_kernel(%arg0: i32, %arg1: memref<1x128xf32, #tpu.memory_space<vmem>>, %arg2: memref<1x128xf32, #tpu.memory_space<vmem>>, %arg3: memref<128x1xf32, #tpu.memory_space<vmem>>, %arg4: memref<128x1xf32, #tpu.memory_space<vmem>>, %arg5: memref<128x128xf32, #tpu.memory_space<vmem>>) attributes {dimension_semantics = [#tpu.dimension_semantics<arbitrary>], iteration_bounds = array<i64: 1>, scalar_prefetch = 0 : i64, scratch_operands = 0 : i64, tpu.core_type = #tpu.core_type<tc>, window_params = [{pipeline_mode = #tpu.pipeline_mode<synchronous>, transform_indices = @transform_0, window_bounds = array<i64: 1, 128>}, {pipeline_mode = #tpu.pipeline_mode<synchronous>, transform_indices = @transform_1, window_bounds = array<i64: 1, 128>}, {pipeline_mode = #tpu.pipeline_mode<synchronous>, transform_indices = @transform_2, window_bounds = array<i64: 128, 1>}, {pipeline_mode = #tpu.pipeline_mode<synchronous>, transform_indices = @transform_3, window_bounds = array<i64: 128, 1>}, {pipeline_mode = #tpu.pipeline_mode<synchronous>, transform_indices = @transform_4, window_bounds = array<i64: 128, 128>}]} {
    %c0 = arith.constant 0 : index
    %c0_0 = arith.constant 0 : index
    %0 = vector.load %arg1[%c0, %c0_0] : memref<1x128xf32, #tpu.memory_space<vmem>>, vector<1x128xf32>
    %1 = arith.negf %0 : vector<1x128xf32>
    %2 = math.exp %1 : vector<1x128xf32>
    %cst = arith.constant 1.000000e+00 : f32
    %3 = vector.broadcast %cst : f32 to vector<1x128xf32>
    %4 = arith.addf %3, %2 : vector<1x128xf32>
    %5 = arith.divf %3, %4 : vector<1x128xf32>
    %cst_1 = arith.constant 5.000000e-01 : f32
    %6 = vector.broadcast %cst_1 : f32 to vector<1x128xf32>
    %7 = arith.mulf %5, %6 : vector<1x128xf32>
    %cst_2 = arith.constant 1.000000e-01 : f32
    %8 = vector.broadcast %cst_2 : f32 to vector<1x128xf32>
    %9 = arith.addf %8, %7 : vector<1x128xf32>
    %c0_3 = arith.constant 0 : index
    %c0_4 = arith.constant 0 : index
    %10 = vector.load %arg2[%c0_3, %c0_4] : memref<1x128xf32, #tpu.memory_space<vmem>>, vector<1x128xf32>
    %cst_5 = arith.constant 3.000000e-01 : f32
    %11 = vector.broadcast %cst_5 : f32 to vector<1x128xf32>
    %12 = arith.mulf %10, %11 : vector<1x128xf32>
    %cst_6 = arith.constant 1.000000e+00 : f32
    %13 = vector.broadcast %cst_6 : f32 to vector<1x128xf32>
    %14 = arith.addf %13, %12 : vector<1x128xf32>
    %15 = arith.mulf %9, %9 : vector<1x128xf32>
    %cst_7 = arith.constant 5.000000e-01 : f32
    %16 = vector.broadcast %cst_7 : f32 to vector<1x128xf32>
    %17 = arith.divf %16, %15 : vector<1x128xf32>
    %c0_8 = arith.constant 0 : index
    %c0_9 = arith.constant 0 : index
    %18 = vector.load %arg3[%c0_8, %c0_9] : memref<128x1xf32, #tpu.memory_space<vmem>>, vector<128x1xf32>
    %cst_10 = arith.constant 0.000000e+00 : f32
    %19 = vector.broadcast %cst_10 : f32 to vector<128x1xf32>
    %20 = arith.subf %19, %18 : vector<128x1xf32>
    %21 = vector.broadcast %20 : vector<128x1xf32> to vector<128x128xf32>
    %22 = vector.broadcast %17 : vector<1x128xf32> to vector<128x128xf32>
    %23 = arith.mulf %21, %22 : vector<128x128xf32>
    %c0_11 = arith.constant 0 : index
    %c0_12 = arith.constant 0 : index
    %24 = vector.load %arg4[%c0_11, %c0_12] : memref<128x1xf32, #tpu.memory_space<vmem>>, vector<128x1xf32>
    %25 = arith.mulf %14, %14 : vector<1x128xf32>
    %26 = vector.broadcast %24 : vector<128x1xf32> to vector<128x128xf32>
    %27 = vector.broadcast %25 : vector<1x128xf32> to vector<128x128xf32>
    %28 = arith.mulf %26, %27 : vector<128x128xf32>
    %29 = vector.broadcast %17 : vector<1x128xf32> to vector<128x128xf32>
    %30 = arith.mulf %28, %29 : vector<128x128xf32>
    %31 = arith.subf %23, %30 : vector<128x128xf32>
    %32 = math.exp %31 : vector<128x128xf32>
    %cst_13 = arith.constant 3.000000e-02 : f32
    %33 = vector.broadcast %cst_13 : f32 to vector<128x128xf32>
    %34 = arith.mulf %32, %33 : vector<128x128xf32>
    %35 = tpu.iota {dimensions = array<i32: 0>} : vector<128x128xi32>
    %36 = tpu.iota {dimensions = array<i32: 1>} : vector<128x128xi32>
    %c36_i32 = arith.constant 36 : i32
    %37 = vector.broadcast %c36_i32 : i32 to vector<128x128xi32>
    %38 = arith.cmpi slt, %35, %37 : vector<128x128xi32>
    %c8_i32 = arith.constant 8 : i32
    %39 = vector.broadcast %c8_i32 : i32 to vector<128x128xi32>
    %40 = arith.cmpi slt, %36, %39 : vector<128x128xi32>
    %41 = arith.andi %38, %40 : vector<128x128xi1>
    %cst_14 = arith.constant 0.000000e+00 : f32
    %42 = vector.broadcast %cst_14 : f32 to vector<128x128xf32>
    %43 = arith.select %41, %34, %42 : vector<128x128xi1>, vector<128x128xf32>
    %c0_15 = arith.constant 0 : index
    %c0_16 = arith.constant 0 : index
    %44 = vector.load %arg5[%c0_15, %c0_16] : memref<128x128xf32, #tpu.memory_space<vmem>>, vector<128x128xf32>
    tpu.vector_store %arg5[%c0_15, %c0_16], %43 {strides = array<i32>} : memref<128x128xf32, #tpu.memory_space<vmem>>, vector<128x128xf32>,
    return
  }
  func.func @transform_0(%arg0: i32) -> (i32, i32) {
    %c0_i32 = arith.constant 0 : i32
    %c0_i32_0 = arith.constant 0 : i32
    %c0_i32_1 = arith.constant 0 : i32
    return %c0_i32, %c0_i32_0 : i32, i32
  }
  func.func @transform_1(%arg0: i32) -> (i32, i32) {
    %c0_i32 = arith.constant 0 : i32
    %c0_i32_0 = arith.constant 0 : i32
    %c0_i32_1 = arith.constant 0 : i32
    return %c0_i32, %c0_i32_0 : i32, i32
  }
  func.func @transform_2(%arg0: i32) -> (i32, i32) {
    %c0_i32 = arith.constant 0 : i32
    %c0_i32_0 = arith.constant 0 : i32
    %c0_i32_1 = arith.constant 0 : i32
    return %c0_i32, %c0_i32_0 : i32, i32
  }
  func.func @transform_3(%arg0: i32) -> (i32, i32) {
    %c0_i32 = arith.constant 0 : i32
    %c0_i32_0 = arith.constant 0 : i32
    %c0_i32_1 = arith.constant 0 : i32
    return %c0_i32, %c0_i32_0 : i32, i32
  }
  func.func @transform_4(%arg0: i32) -> (i32, i32) {
    %c0_i32 = arith.constant 0 : i32
    %c0_i32_0 = arith.constant 0 : i32
    %c0_i32_1 = arith.constant 0 : i32
    return %c0_i32, %c0_i32_0 : i32, i32
  }
}

module attributes {stable_mosaic.version = 11 : i64} {
  func.func @_conv_matmul_kernel(%arg0: i32, %arg1: memref<256x128xf32, #tpu.memory_space<vmem>>, %arg2: memref<128x128xf32, #tpu.memory_space<vmem>>, %arg3: memref<256x128xf32, #tpu.memory_space<vmem>>) attributes {dimension_semantics = [#tpu.dimension_semantics<parallel>], iteration_bounds = array<i64: 2>, scalar_prefetch = 0 : i64, scratch_operands = 0 : i64, tpu.core_type = #tpu.core_type<tc>, window_params = [{transform_indices = @transform_0, window_bounds = array<i64: 256, 128>}, {pipeline_mode = #tpu.pipeline_mode<synchronous>, transform_indices = @transform_1, window_bounds = array<i64: 128, 128>}, {transform_indices = @transform_2, window_bounds = array<i64: 256, 128>}]} {
    %c0 = arith.constant 0 : index
    %c0_0 = arith.constant 0 : index
    %0 = vector.load %arg1[%c0, %c0_0] : memref<256x128xf32, #tpu.memory_space<vmem>>, vector<256x128xf32>
    %c0_1 = arith.constant 0 : index
    %c0_2 = arith.constant 0 : index
    %1 = vector.load %arg2[%c0_1, %c0_2] : memref<128x128xf32, #tpu.memory_space<vmem>>, vector<128x128xf32>
    %cst = arith.constant dense<0.000000e+00> : vector<256x128xf32>
    %2 = tpu.matmul %0, %1, %cst {dimension_numbers = #tpu.dot_dimension_numbers<[1], [0], [0], [1], [0, 0, 1, 1], [], []>} : vector<256x128xf32>, vector<128x128xf32>, vector<256x128xf32> -> vector<256x128xf32>
    %c0_3 = arith.constant 0 : index
    %c0_4 = arith.constant 0 : index
    %3 = vector.load %arg3[%c0_3, %c0_4] : memref<256x128xf32, #tpu.memory_space<vmem>>, vector<256x128xf32>
    tpu.vector_store %arg3[%c0_3, %c0_4], %2 {strides = array<i32>} : memref<256x128xf32, #tpu.memory_space<vmem>>, vector<256x128xf32>,
    return
  }
  func.func @transform_0(%arg0: i32) -> (i32, i32) {
    %c0_i32 = arith.constant 0 : i32
    %c0_i32_0 = arith.constant 0 : i32
    return %arg0, %c0_i32 : i32, i32
  }
  func.func @transform_1(%arg0: i32) -> (i32, i32) {
    %c0_i32 = arith.constant 0 : i32
    %c0_i32_0 = arith.constant 0 : i32
    %c0_i32_1 = arith.constant 0 : i32
    return %c0_i32, %c0_i32_0 : i32, i32
  }
  func.func @transform_2(%arg0: i32) -> (i32, i32) {
    %c0_i32 = arith.constant 0 : i32
    %c0_i32_0 = arith.constant 0 : i32
    return %arg0, %c0_i32 : i32, i32
  }
}

</mosaic_0001>

<llo_original>
// kernel: my_conv2d_forward.3
$region0: #{my_conv2d_forward.3}
  #allocation0 [shape = 'u32[]', space=smem, size = 0x4, offset = 0x4, fixed_abs, tag = 'smem constant byte address 0x4 - core index']
  #allocation1 [shape = 'u32[72,128]{1,0:T(1,128)}', space=vmem, size = 0x9000, scoped, tag = 'internal scratch']
  %s0 = inlined_call_operand.vmem [shape: f32[512,128], index: 0, kind: input, shape index: {}]
  %s1 = inlined_call_operand.vmem [shape: f32[128,128], index: 1, kind: input, shape index: {}]
  %s2 = inlined_call_operand.vmem [shape: f32[512,128], index: 2, kind: output, shape index: {}]
  %s3 = sld [smem:[#allocation0]]
  $region41: #{my_conv2d_forward.3} parent=0
    _
  %s5 = ssub.s32 1, %s3
  %s6 = scalar_select 0, %s5, %s3
  loop: start=0, step=1, limit=4
  $region2: #{my_conv2d_forward.3} parent=0 // loop_pre_header
    _
  $region3: #{my_conv2d_forward.3} parent=0 // loop_header
    %s8 = sphi 0, %s12
    %p9 = scmp.ge.s32.totalorder %s8, 4
    %s18 = sphi 0, %s20
    %s21 = sphi 0, %s18
    %s22 = sphi 0, %s21
    %s38 = sphi 0, %s22
    %s42 = sphi 0, %s42
    %s44 = sphi 0, %s42
    %s45 = sphi 0, %s44
    %s59 = sphi 0, %s45
    %s65 = sphi 0, %s67
    %s68 = sphi 0, %s65
    %s69 = sphi 0, %s68
    %s85 = sphi 0, %s69
  $region4: #{my_conv2d_forward.3} parent=0 // loop_header_branch
    %11 = sbr.rel (%p9) target = $region8
  $region5: #{my_conv2d_forward.3} parent=0 // loop_body
    %s13 = ssub.s32 %s8, 1
    %s14 = ssub.s32 %s8, 2
    %s15 = sadd.s32 %s8, 1
    %s16 = ssub.s32 %s8, %s15
    %p17 = scmp.eq.s32.totalorder %s16, 0
    %s19 = sadd.s32 %s18, 1
    %s20 = scalar_select %p17, %s18, %s19
    %p23 = pneg %p17
    %p24 = scmp.eq.s32.totalorder %s8, 1
    %p25 = por %p23, %p24
    %p26 = scmp.ne.s32.totalorder %s18, %s21
    %p27 = scmp.eq.s32.totalorder %s8, 0
    %p28 = por %p26, %p27
    %p29 = scmp.ne.s32.totalorder %s18, %s21
    %p30 = scmp.eq.s32.totalorder %s13, 1
    %p31 = por %p29, %p30
    %p32 = scmp.ne.s32.totalorder %s21, %s22
    %p33 = scmp.eq.s32.totalorder %s13, 0
    %p34 = por %p32, %p33
    %p35 = scmp.ne.s32.totalorder %s21, %s22
    %p36 = scmp.eq.s32.totalorder %s14, 1
    %p37 = por %p35, %p36
    %p39 = scmp.ne.s32.totalorder %s22, %s38
    %p40 = scmp.eq.s32.totalorder %s14, 0
    %p41 = por %p39, %p40
    %s43 = sadd.s32 %s42, 1
    %p46 = scmp.eq.s32.totalorder %s8, 1
    %p47 = scmp.ne.s32.totalorder %s42, %s44
    %p48 = scmp.eq.s32.totalorder %s8, 0
    %p49 = por %p47, %p48
    %p50 = scmp.ne.s32.totalorder %s42, %s44
    %p51 = scmp.eq.s32.totalorder %s13, 1
    %p52 = por %p50, %p51
    %p53 = scmp.ne.s32.totalorder %s44, %s45
    %p54 = scmp.eq.s32.totalorder %s13, 0
    %p55 = por %p53, %p54
    %p56 = scmp.ne.s32.totalorder %s44, %s45
    %p57 = scmp.eq.s32.totalorder %s14, 1
    %p58 = por %p56, %p57
    %p60 = scmp.ne.s32.totalorder %s45, %s59
    %p61 = scmp.eq.s32.totalorder %s14, 0
    %p62 = por %p60, %p61
    %s63 = ssub.s32 %s8, %s15
    %p64 = scmp.eq.s32.totalorder %s63, 0
    %s66 = sadd.s32 %s65, 1
    %s67 = scalar_select %p64, %s65, %s66
    %p70 = pneg %p64
    %p71 = scmp.eq.s32.totalorder %s8, 1
    %p72 = por %p70, %p71
    %p73 = scmp.ne.s32.totalorder %s65, %s68
    %p74 = scmp.eq.s32.totalorder %s8, 0
    %p75 = por %p73, %p74
    %p76 = scmp.ne.s32.totalorder %s65, %s68
    %p77 = scmp.eq.s32.totalorder %s13, 1
    %p78 = por %p76, %p77
    %p79 = scmp.ne.s32.totalorder %s68, %s69
    %p80 = scmp.eq.s32.totalorder %s13, 0
    %p81 = por %p79, %p80
    %p82 = scmp.ne.s32.totalorder %s68, %s69
    %p83 = scmp.eq.s32.totalorder %s14, 1
    %p84 = por %p82, %p83
    %p86 = scmp.ne.s32.totalorder %s69, %s85
    %p87 = scmp.eq.s32.totalorder %s14, 0
    %p88 = por %p86, %p87
    %p89 = scmp.le.s32.totalorder 1, %s8
    %p90 = scmp.lt.s32.totalorder %s8, 3
    %p91 = pnand %p89, %p90
    %p92 = pneg %p91
    // Predicated region
    $region9: #{my_conv2d_forward.3} parent=5 // pred_check
      _
    $region10: #{my_conv2d_forward.3} parent=5 // pred_check_branch
      %94 = sbr.rel (%p91) target = $region12
    $region11: #{my_conv2d_forward.3} parent=5 // pred_region
      %s95 = ssub.s32 %s8, 1
      // Predicated region
      $region13: #{my_conv2d_forward.3} parent=11 // pred_check
        %p96 = pneg %p55
      $region14: #{my_conv2d_forward.3} parent=11 // pred_check_branch
        %98 = sbr.rel (%p96) target = $region16
      $region15: #{my_conv2d_forward.3} parent=11 // pred_region
        _
      $region16: #{my_conv2d_forward.3} parent=11 // pred_fallthru
        _
    $region12: #{my_conv2d_forward.3} parent=5 // pred_fallthru
      _
    %p99 = scmp.lt.s32.totalorder %s8, 2
    // Predicated region
    $region17: #{my_conv2d_forward.3} parent=5 // pred_check
      %p100 = pneg %p99
    $region18: #{my_conv2d_forward.3} parent=5 // pred_check_branch
      %102 = sbr.rel (%p100) target = $region20
    $region19: #{my_conv2d_forward.3} parent=5 // pred_region
      // Predicated region
      $region21: #{my_conv2d_forward.3} parent=19 // pred_check
        %p103 = pneg %p28
      $region22: #{my_conv2d_forward.3} parent=19 // pred_check_branch
        %105 = sbr.rel (%p103) target = $region24
      $region23: #{my_conv2d_forward.3} parent=19 // pred_region
        %s106 = smul.u32 32, %s8
        %p107 = scmp.lt.s32.totalorder %s106, 63
        %s108 = scalar_select %p107, %s106, 63
        %s109 = smul.addr %s108, 8
        %s110 = scalar_lea.vmem %s0, %s109
        %s111 = smul.u32 32, %s8
      $region24: #{my_conv2d_forward.3} parent=19 // pred_fallthru
        _
    $region20: #{my_conv2d_forward.3} parent=5 // pred_fallthru
      _
    %p112 = scmp.le.s32.totalorder 1, %s8
    %p113 = scmp.lt.s32.totalorder %s8, 3
    %p114 = pnand %p112, %p113
    %p115 = pneg %p114
    // Predicated region
    $region25: #{my_conv2d_forward.3} parent=5 // pred_check
      _
    $region26: #{my_conv2d_forward.3} parent=5 // pred_check_branch
      %117 = sbr.rel (%p114) target = $region28
    $region27: #{my_conv2d_forward.3} parent=5 // pred_region
      %s118 = ssub.s32 %s8, 1
      %s119 = smul.u32 32, %s13
      %p120 = scmp.lt.s32.totalorder %s119, 63
      %s121 = scalar_select %p120, %s119, 63
      %s122 = smul.addr %s121, 8
      %s123 = scalar_lea.vmem %s0, %s122
      %p124 = pneg %p34
      %p125 = pneg %p31
      %p126 = pneg %p55
      %p127 = pneg %p52
      %p128 = pneg %p81
      %p129 = pneg %p78
      %s130 = smul.u32 32, %s13
      %p131 = scmp.lt.s32.totalorder %s130, 63
      %s132 = scalar_select %p131, %s130, 63
      %s133 = smul.addr %s132, 8
      %s134 = scalar_lea.vmem %s2, %s133
      %s135 = smul.u32 32, %s13
      %p136 = scmp.lt.s32.totalorder %s135, 63
      %s137 = scalar_select %p136, %s135, 63
      %s138 = smul.addr %s137, 8
      %s139 = scalar_lea.vmem %s0, %s138
      %s140 = smul.u32 32, %s13
      %s141 = smul.u32 32, %s13
      %p142 = scmp.lt.s32.totalorder %s141, 63
      %s143 = scalar_select %p142, %s141, 63
      %s144 = smul.addr %s143, 8
      %s145 = scalar_lea.vmem %s2, %s144
      %s146 = smul.u32 32, %s13
      %v147 = vld [vmem:[%s139] sm:$0xff]
      %v148 = vld [vmem:[%s139 + $0x8] sm:$0xff]
      %v149 = vld [vmem:[%s139 + $0x10] sm:$0xff]
      %v150 = vld [vmem:[%s139 + $0x18] sm:$0xff]
      %v151 = vld [vmem:[%s139 + $0x20] sm:$0xff]
      %v152 = vld [vmem:[%s139 + $0x28] sm:$0xff]
      %v153 = vld [vmem:[%s139 + $0x30] sm:$0xff]
      %v154 = vld [vmem:[%s139 + $0x38] sm:$0xff]
      %v155 = vld [vmem:[%s139 + $0x40] sm:$0xff]
      %v156 = vld [vmem:[%s139 + $0x48] sm:$0xff]
      %v157 = vld [vmem:[%s139 + $0x50] sm:$0xff]
      %v158 = vld [vmem:[%s139 + $0x58] sm:$0xff]
      %v159 = vld [vmem:[%s139 + $0x60] sm:$0xff]
      %v160 = vld [vmem:[%s139 + $0x68] sm:$0xff]
      %v161 = vld [vmem:[%s139 + $0x70] sm:$0xff]
      %v162 = vld [vmem:[%s139 + $0x78] sm:$0xff]
      %v163 = vld [vmem:[%s139 + $0x80] sm:$0xff]
      %v164 = vld [vmem:[%s139 + $0x88] sm:$0xff]
      %v165 = vld [vmem:[%s139 + $0x90] sm:$0xff]
      %v166 = vld [vmem:[%s139 + $0x98] sm:$0xff]
      %v167 = vld [vmem:[%s139 + $0xa0] sm:$0xff]
      %v168 = vld [vmem:[%s139 + $0xa8] sm:$0xff]
      %v169 = vld [vmem:[%s139 + $0xb0] sm:$0xff]
      %v170 = vld [vmem:[%s139 + $0xb8] sm:$0xff]
      %v171 = vld [vmem:[%s139 + $0xc0] sm:$0xff]
      %v172 = vld [vmem:[%s139 + $0xc8] sm:$0xff]
      %v173 = vld [vmem:[%s139 + $0xd0] sm:$0xff]
      %v174 = vld [vmem:[%s139 + $0xd8] sm:$0xff]
      %v175 = vld [vmem:[%s139 + $0xe0] sm:$0xff]
      %v176 = vld [vmem:[%s139 + $0xe8] sm:$0xff]
      %v177 = vld [vmem:[%s139 + $0xf0] sm:$0xff]
      %v178 = vld [vmem:[%s139 + $0xf8] sm:$0xff]
      %v179 = vld [vmem:[%s1] sm:$0xff]
      %v180 = vld [vmem:[%s1 + $0x8] sm:$0xff]
      %v181 = vld [vmem:[%s1 + $0x10] sm:$0xff]
      %v182 = vld [vmem:[%s1 + $0x18] sm:$0xff]
      %v183 = vld [vmem:[%s1 + $0x20] sm:$0xff]
      %v184 = vld [vmem:[%s1 + $0x28] sm:$0xff]
      %v185 = vld [vmem:[%s1 + $0x30] sm:$0xff]
      %v186 = vld [vmem:[%s1 + $0x38] sm:$0xff]
      %v187 = vld [vmem:[%s1 + $0x40] sm:$0xff]
      %v188 = vld [vmem:[%s1 + $0x48] sm:$0xff]
      %v189 = vld [vmem:[%s1 + $0x50] sm:$0xff]
      %v190 = vld [vmem:[%s1 + $0x58] sm:$0xff]
      %v191 = vld [vmem:[%s1 + $0x60] sm:$0xff]
      %v192 = vld [vmem:[%s1 + $0x68] sm:$0xff]
      %v193 = vld [vmem:[%s1 + $0x70] sm:$0xff]
      %v194 = vld [vmem:[%s1 + $0x78] sm:$0xff]
      %195 = vmatpush.msra.mxu0 %v194
      %196 = vmatpush.msra.mxu0 %v193
      %197 = vmatpush.msra.mxu0 %v192
      %198 = vmatpush.msra.mxu0 %v191
      %199 = vmatpush.msra.mxu0 %v190
      %200 = vmatpush.msra.mxu0 %v189
      %201 = vmatpush.msra.mxu0 %v188
      %202 = vmatpush.msra.mxu0 %v187
      %203 = vmatpush.msra.mxu0 %v186
      %204 = vmatpush.msra.mxu0 %v185
      %205 = vmatpush.msra.mxu0 %v184
      %206 = vmatpush.msra.mxu0 %v183
      %207 = vmatpush.msra.mxu0 %v182
      %208 = vmatpush.msra.mxu0 %v181
      %209 = vmatpush.msra.mxu0 %v180
      %210 = vmatpush.msra.mxu0 %v179
      %211 = vmatmul.f32.gmra.mxu0 %v147
      %v212 = vpop.f32.mrf.mxu0
      %v213 = vadd.f32 0.0, %v212
      %214 = vmatmul.f32.gmra.mxu0 %v148
      %v215 = vpop.f32.mrf.mxu0
      %v216 = vadd.f32 0.0, %v215
      %217 = vmatmul.f32.gmra.mxu0 %v149
      %v218 = vpop.f32.mrf.mxu0
      %v219 = vadd.f32 0.0, %v218
      %220 = vmatmul.f32.gmra.mxu0 %v150
      %v221 = vpop.f32.mrf.mxu0
      %v222 = vadd.f32 0.0, %v221
      %223 = vmatmul.f32.gmra.mxu0 %v151
      %v224 = vpop.f32.mrf.mxu0
      %v225 = vadd.f32 0.0, %v224
      %226 = vmatmul.f32.gmra.mxu0 %v152
      %v227 = vpop.f32.mrf.mxu0
      %v228 = vadd.f32 0.0, %v227
      %229 = vmatmul.f32.gmra.mxu0 %v153
      %v230 = vpop.f32.mrf.mxu0
      %v231 = vadd.f32 0.0, %v230
      %232 = vmatmul.f32.gmra.mxu0 %v154
      %v233 = vpop.f32.mrf.mxu0
      %v234 = vadd.f32 0.0, %v233
      %235 = vmatmul.f32.gmra.mxu0 %v155
      %v236 = vpop.f32.mrf.mxu0
      %v237 = vadd.f32 0.0, %v236
      %238 = vmatmul.f32.gmra.mxu0 %v156
      %v239 = vpop.f32.mrf.mxu0
      %v240 = vadd.f32 0.0, %v239
      %241 = vmatmul.f32.gmra.mxu0 %v157
      %v242 = vpop.f32.mrf.mxu0
      %v243 = vadd.f32 0.0, %v242
      %244 = vmatmul.f32.gmra.mxu0 %v158
      %v245 = vpop.f32.mrf.mxu0
      %v246 = vadd.f32 0.0, %v245
      %247 = vmatmul.f32.gmra.mxu0 %v159
      %v248 = vpop.f32.mrf.mxu0
      %v249 = vadd.f32 0.0, %v248
      %250 = vmatmul.f32.gmra.mxu0 %v160
      %v251 = vpop.f32.mrf.mxu0
      %v252 = vadd.f32 0.0, %v251
      %253 = vmatmul.f32.gmra.mxu0 %v161
      %v254 = vpop.f32.mrf.mxu0
      %v255 = vadd.f32 0.0, %v254
      %256 = vmatmul.f32.gmra.mxu0 %v162
      %v257 = vpop.f32.mrf.mxu0
      %v258 = vadd.f32 0.0, %v257
      %259 = vmatmul.f32.gmra.mxu0 %v163
      %v260 = vpop.f32.mrf.mxu0
      %v261 = vadd.f32 0.0, %v260
      %262 = vmatmul.f32.gmra.mxu0 %v164
      %v263 = vpop.f32.mrf.mxu0
      %v264 = vadd.f32 0.0, %v263
      %265 = vmatmul.f32.gmra.mxu0 %v165
      %v266 = vpop.f32.mrf.mxu0
      %v267 = vadd.f32 0.0, %v266
      %268 = vmatmul.f32.gmra.mxu0 %v166
      %v269 = vpop.f32.mrf.mxu0
      %v270 = vadd.f32 0.0, %v269
      %271 = vmatmul.f32.gmra.mxu0 %v167
      %v272 = vpop.f32.mrf.mxu0
      %v273 = vadd.f32 0.0, %v272
      %274 = vmatmul.f32.gmra.mxu0 %v168
      %v275 = vpop.f32.mrf.mxu0
      %v276 = vadd.f32 0.0, %v275
      %277 = vmatmul.f32.gmra.mxu0 %v169
      %v278 = vpop.f32.mrf.mxu0
      %v279 = vadd.f32 0.0, %v278
      %280 = vmatmul.f32.gmra.mxu0 %v170
      %v281 = vpop.f32.mrf.mxu0
      %v282 = vadd.f32 0.0, %v281
      %283 = vmatmul.f32.gmra.mxu0 %v171
      %v284 = vpop.f32.mrf.mxu0
      %v285 = vadd.f32 0.0, %v284
      %286 = vmatmul.f32.gmra.mxu0 %v172
      %v287 = vpop.f32.mrf.mxu0
      %v288 = vadd.f32 0.0, %v287
      %289 = vmatmul.f32.gmra.mxu0 %v173
      %v290 = vpop.f32.mrf.mxu0
      %v291 = vadd.f32 0.0, %v290
      %292 = vmatmul.f32.gmra.mxu0 %v174
      %v293 = vpop.f32.mrf.mxu0
      %v294 = vadd.f32 0.0, %v293
      %295 = vmatmul.f32.gmra.mxu0 %v175
      %v296 = vpop.f32.mrf.mxu0
      %v297 = vadd.f32 0.0, %v296
      %298 = vmatmul.f32.gmra.mxu0 %v176
      %v299 = vpop.f32.mrf.mxu0
      %v300 = vadd.f32 0.0, %v299
      %301 = vmatmul.f32.gmra.mxu0 %v177
      %v302 = vpop.f32.mrf.mxu0
      %v303 = vadd.f32 0.0, %v302
      %304 = vmatmul.f32.gmra.mxu0 %v178
      %v305 = vpop.f32.mrf.mxu0
      %v306 = vadd.f32 0.0, %v305
      %307 = vdwg.mxu0
      %308 = vst [vmem:[%s145] sm:$0xff] %v213
      %309 = vst [vmem:[%s145 + $0x8] sm:$0xff] %v216
      %310 = vst [vmem:[%s145 + $0x10] sm:$0xff] %v219
      %311 = vst [vmem:[%s145 + $0x18] sm:$0xff] %v222
      %312 = vst [vmem:[%s145 + $0x20] sm:$0xff] %v225
      %313 = vst [vmem:[%s145 + $0x28] sm:$0xff] %v228
      %314 = vst [vmem:[%s145 + $0x30] sm:$0xff] %v231
      %315 = vst [vmem:[%s145 + $0x38] sm:$0xff] %v234
      %316 = vst [vmem:[%s145 + $0x40] sm:$0xff] %v237
      %317 = vst [vmem:[%s145 + $0x48] sm:$0xff] %v240
      %318 = vst [vmem:[%s145 + $0x50] sm:$0xff] %v243
      %319 = vst [vmem:[%s145 + $0x58] sm:$0xff] %v246
      %320 = vst [vmem:[%s145 + $0x60] sm:$0xff] %v249
      %321 = vst [vmem:[%s145 + $0x68] sm:$0xff] %v252
      %322 = vst [vmem:[%s145 + $0x70] sm:$0xff] %v255
      %323 = vst [vmem:[%s145 + $0x78] sm:$0xff] %v258
      %324 = vst [vmem:[%s145 + $0x80] sm:$0xff] %v261
      %325 = vst [vmem:[%s145 + $0x88] sm:$0xff] %v264
      %326 = vst [vmem:[%s145 + $0x90] sm:$0xff] %v267
      %327 = vst [vmem:[%s145 + $0x98] sm:$0xff] %v270
      %328 = vst [vmem:[%s145 + $0xa0] sm:$0xff] %v273
      %329 = vst [vmem:[%s145 + $0xa8] sm:$0xff] %v276
      %330 = vst [vmem:[%s145 + $0xb0] sm:$0xff] %v279
      %331 = vst [vmem:[%s145 + $0xb8] sm:$0xff] %v282
      %332 = vst [vmem:[%s145 + $0xc0] sm:$0xff] %v285
      %333 = vst [vmem:[%s145 + $0xc8] sm:$0xff] %v288
      %334 = vst [vmem:[%s145 + $0xd0] sm:$0xff] %v291
      %335 = vst [vmem:[%s145 + $0xd8] sm:$0xff] %v294
      %336 = vst [vmem:[%s145 + $0xe0] sm:$0xff] %v297
      %337 = vst [vmem:[%s145 + $0xe8] sm:$0xff] %v300
      %338 = vst [vmem:[%s145 + $0xf0] sm:$0xff] %v303
      %339 = vst [vmem:[%s145 + $0xf8] sm:$0xff] %v306
      %s340 = smul.u32 32, %s13
      %p341 = scmp.lt.s32.totalorder %s340, 63
      %s342 = scalar_select %p341, %s340, 63
      %s343 = smul.addr %s342, 8
      %s344 = scalar_lea.vmem %s2, %s343
      // Predicated region
      $region29: #{my_conv2d_forward.3} parent=27 // pred_check
        %p345 = pneg %p78
      $region30: #{my_conv2d_forward.3} parent=27 // pred_check_branch
        %347 = sbr.rel (%p345) target = $region32
      $region31: #{my_conv2d_forward.3} parent=27 // pred_region
        %s348 = smul.u32 32, %s13
      $region32: #{my_conv2d_forward.3} parent=27 // pred_fallthru
        _
    $region28: #{my_conv2d_forward.3} parent=5 // pred_fallthru
      _
    %p349 = scmp.le.s32.totalorder 2, %s8
    // Predicated region
    $region33: #{my_conv2d_forward.3} parent=5 // pred_check
      %p350 = pneg %p349
    $region34: #{my_conv2d_forward.3} parent=5 // pred_check_branch
      %352 = sbr.rel (%p350) target = $region36
    $region35: #{my_conv2d_forward.3} parent=5 // pred_region
      %s353 = ssub.s32 %s8, 2
      // Predicated region
      $region37: #{my_conv2d_forward.3} parent=35 // pred_check
        %p354 = pneg %p84
      $region38: #{my_conv2d_forward.3} parent=35 // pred_check_branch
        %356 = sbr.rel (%p354) target = $region40
      $region39: #{my_conv2d_forward.3} parent=35 // pred_region
        %s357 = smul.u32 32, %s14
        %p358 = scmp.lt.s32.totalorder %s357, 63
        %s359 = scalar_select %p358, %s357, 63
        %s360 = smul.addr %s359, 8
        %s361 = scalar_lea.vmem %s2, %s360
      $region40: #{my_conv2d_forward.3} parent=35 // pred_fallthru
        _
    $region36: #{my_conv2d_forward.3} parent=5 // pred_fallthru
      _
  $region6: #{my_conv2d_forward.3} parent=0 // loop_footer
    %s12 = sadd.s32 1, %s8
  $region7: #{my_conv2d_forward.3} parent=0 // loop_footer_branch
    %7 = sbr.rel target = $region3
  $region8: #{my_conv2d_forward.3} parent=0 // loop_exit
    _

// kernel: my_conv2d_forward.2
$region0: #{my_conv2d_forward.2}
  #allocation0 [shape = 'u32[]', space=smem, size = 0x4, offset = 0x4, fixed_abs, tag = 'smem constant byte address 0x4 - core index']
  #allocation1 [shape = 'u32[72,128]{1,0:T(1,128)}', space=vmem, size = 0x9000, scoped, tag = 'internal scratch']
  %s0 = inlined_call_operand.vmem [shape: f32[1,128], index: 0, kind: input, shape index: {}]
  %s1 = inlined_call_operand.vmem [shape: f32[1,128], index: 1, kind: input, shape index: {}]
  %s2 = inlined_call_operand.vmem [shape: f32[128,1], index: 2, kind: input, shape index: {}]
  %s3 = inlined_call_operand.vmem [shape: f32[128,1], index: 3, kind: input, shape index: {}]
  %s4 = inlined_call_operand.vmem [shape: f32[128,128], index: 4, kind: output, shape index: {}]
  %s5 = sld [smem:[#allocation0]]
  $region26: #{my_conv2d_forward.2} parent=0
    _
  %s7 = ssub.s32 1, %s5
  %s8 = scalar_select 0, %s7, %s5
  // Predicated region
  $region2: #{my_conv2d_forward.2} parent=0 // pred_check
    _
  $region3: #{my_conv2d_forward.2} parent=0 // pred_check_branch
    %10 = sbr.rel (0) target = $region5
  $region4: #{my_conv2d_forward.2} parent=0 // pred_region
    _
  $region5: #{my_conv2d_forward.2} parent=0 // pred_fallthru
    _
  // Predicated region
  $region6: #{my_conv2d_forward.2} parent=0 // pred_check
    _
  $region7: #{my_conv2d_forward.2} parent=0 // pred_check_branch
    %12 = sbr.rel (0) target = $region9
  $region8: #{my_conv2d_forward.2} parent=0 // pred_region
    _
  $region9: #{my_conv2d_forward.2} parent=0 // pred_fallthru
    _
  // Predicated region
  $region10: #{my_conv2d_forward.2} parent=0 // pred_check
    _
  $region11: #{my_conv2d_forward.2} parent=0 // pred_check_branch
    %14 = sbr.rel (0) target = $region13
  $region12: #{my_conv2d_forward.2} parent=0 // pred_region
    _
  $region13: #{my_conv2d_forward.2} parent=0 // pred_fallthru
    _
  // Predicated region
  $region14: #{my_conv2d_forward.2} parent=0 // pred_check
    _
  $region15: #{my_conv2d_forward.2} parent=0 // pred_check_branch
    %16 = sbr.rel (0) target = $region17
  $region16: #{my_conv2d_forward.2} parent=0 // pred_region
    _
  $region17: #{my_conv2d_forward.2} parent=0 // pred_fallthru
    _
  %v17 = vld [vmem:[%s0] sm:$0x1]
  %v18 = vxor.u32 %v17, 2147483648
  %v19 = vmul.f32 %v18, 1.442695
  %v20 = vpow.pop %v19
  %v21 = vadd.f32 %v20, 1.0
  %v22 = vrcp.pop %v21
  %v23 = vmul.f32 %v21, %v22
  %v24 = vsub.f32 1.0, %v23
  %v25 = vmul.f32 %v22, %v24
  %v26 = vadd.f32 %v22, %v25
  %vm27 = vweird.f32 %v21
  %vm28 = vweird.f32 %v22
  %vm29 = vmor %vm27, %vm28
  %v30 = vsel %vm29, %v22, %v26
  %v31 = vand.u32 2147483647, %v21
  %vm32 = vcmp.eq.f32.partialorder %v31, 8.507059e+37
  %v33 = vand.u32 %v21, 2147483648
  %v34 = vor.u32 1.1754944e-38, %v33
  %v35 = vsel %vm32, %v34, %v30
  %v36 = vmul.f32 1.0, %v35
  %v37 = vmul.f32 %v36, 0.5
  %v38 = vadd.f32 %v37, 0.1
  %v39 = vld [vmem:[%s1] sm:$0x1]
  %v40 = vmul.f32 %v39, 0.3
  %v41 = vadd.f32 %v40, 1.0
  %v42 = vmul.f32 %v38, %v38
  %v43 = vrcp.pop %v42
  %v44 = vmul.f32 %v42, %v43
  %v45 = vsub.f32 1.0, %v44
  %v46 = vmul.f32 %v43, %v45
  %v47 = vadd.f32 %v43, %v46
  %vm48 = vweird.f32 %v42
  %vm49 = vweird.f32 %v43
  %vm50 = vmor %vm48, %vm49
  %v51 = vsel %vm50, %v43, %v47
  %v52 = vand.u32 2147483647, %v42
  %vm53 = vcmp.eq.f32.partialorder %v52, 8.507059e+37
  %v54 = vand.u32 %v42, 2147483648
  %v55 = vor.u32 1.1754944e-38, %v54
  %v56 = vsel %vm53, %v55, %v51
  %v57 = vmul.f32 0.5, %v56
  %v58 = vld [vmem:[%s2] sm:$0xff]
  %v59 = vld [vmem:[%s2 + $0x8] sm:$0xff]
  %v60 = vld [vmem:[%s2 + $0x10] sm:$0xff]
  %v61 = vld [vmem:[%s2 + $0x18] sm:$0xff]
  %v62 = vld [vmem:[%s2 + $0x20] sm:$0xff]
  %v63 = vld [vmem:[%s2 + $0x28] sm:$0xff]
  %v64 = vld [vmem:[%s2 + $0x30] sm:$0xff]
  %v65 = vld [vmem:[%s2 + $0x38] sm:$0xff]
  %v66 = vld [vmem:[%s2 + $0x40] sm:$0xff]
  %v67 = vld [vmem:[%s2 + $0x48] sm:$0xff]
  %v68 = vld [vmem:[%s2 + $0x50] sm:$0xff]
  %v69 = vld [vmem:[%s2 + $0x58] sm:$0xff]
  %v70 = vld [vmem:[%s2 + $0x60] sm:$0xff]
  %v71 = vld [vmem:[%s2 + $0x68] sm:$0xff]
  %v72 = vld [vmem:[%s2 + $0x70] sm:$0xff]
  %v73 = vld [vmem:[%s2 + $0x78] sm:$0xff]
  %v74 = vsub.f32 0.0, %v58
  %v75 = vsub.f32 0.0, %v59
  %v76 = vsub.f32 0.0, %v60
  %v77 = vsub.f32 0.0, %v61
  %v78 = vsub.f32 0.0, %v62
  %v79 = vsub.f32 0.0, %v63
  %v80 = vsub.f32 0.0, %v64
  %v81 = vsub.f32 0.0, %v65
  %v82 = vsub.f32 0.0, %v66
  %v83 = vsub.f32 0.0, %v67
  %v84 = vsub.f32 0.0, %v68
  %v85 = vsub.f32 0.0, %v69
  %v86 = vsub.f32 0.0, %v70
  %v87 = vsub.f32 0.0, %v71
  %v88 = vsub.f32 0.0, %v72
  %v89 = vsub.f32 0.0, %v73
  %91 = vset.pattern.permute.xlu0 0
  %92 = vperm.xlu0 %91, %v74
  %v93 = vpop.permute.xlu0 %92
  %96 = vset.pattern.permute.xlu0 0
  %97 = vperm.xlu0 %96, %v75
  %v98 = vpop.permute.xlu0 %97
  %101 = vset.pattern.permute.xlu0 0
  %102 = vperm.xlu0 %101, %v76
  %v103 = vpop.permute.xlu0 %102
  %106 = vset.pattern.permute.xlu0 0
  %107 = vperm.xlu0 %106, %v77
  %v108 = vpop.permute.xlu0 %107
  %111 = vset.pattern.permute.xlu0 0
  %112 = vperm.xlu0 %111, %v78
  %v113 = vpop.permute.xlu0 %112
  %116 = vset.pattern.permute.xlu0 0
  %117 = vperm.xlu0 %116, %v79
  %v118 = vpop.permute.xlu0 %117
  %121 = vset.pattern.permute.xlu0 0
  %122 = vperm.xlu0 %121, %v80
  %v123 = vpop.permute.xlu0 %122
  %126 = vset.pattern.permute.xlu0 0
  %127 = vperm.xlu0 %126, %v81
  %v128 = vpop.permute.xlu0 %127
  %131 = vset.pattern.permute.xlu0 0
  %132 = vperm.xlu0 %131, %v82
  %v133 = vpop.permute.xlu0 %132
  %136 = vset.pattern.permute.xlu0 0
  %137 = vperm.xlu0 %136, %v83
  %v138 = vpop.permute.xlu0 %137
  %141 = vset.pattern.permute.xlu0 0
  %142 = vperm.xlu0 %141, %v84
  %v143 = vpop.permute.xlu0 %142
  %146 = vset.pattern.permute.xlu0 0
  %147 = vperm.xlu0 %146, %v85
  %v148 = vpop.permute.xlu0 %147
  %151 = vset.pattern.permute.xlu0 0
  %152 = vperm.xlu0 %151, %v86
  %v153 = vpop.permute.xlu0 %152
  %156 = vset.pattern.permute.xlu0 0
  %157 = vperm.xlu0 %156, %v87
  %v158 = vpop.permute.xlu0 %157
  %161 = vset.pattern.permute.xlu0 0
  %162 = vperm.xlu0 %161, %v88
  %v163 = vpop.permute.xlu0 %162
  %166 = vset.pattern.permute.xlu0 0
  %167 = vperm.xlu0 %166, %v89
  %v168 = vpop.permute.xlu0 %167
  %v171 = vperm.slane %v57, 0
  %v173 = vmul.f32 %v93, %v171
  %v174 = vmul.f32 %v98, %v171
  %v175 = vmul.f32 %v103, %v171
  %v176 = vmul.f32 %v108, %v171
  %v177 = vmul.f32 %v113, %v171
  %v178 = vmul.f32 %v118, %v171
  %v179 = vmul.f32 %v123, %v171
  %v180 = vmul.f32 %v128, %v171
  %v181 = vmul.f32 %v133, %v171
  %v182 = vmul.f32 %v138, %v171
  %v183 = vmul.f32 %v143, %v171
  %v184 = vmul.f32 %v148, %v171
  %v185 = vmul.f32 %v153, %v171
  %v186 = vmul.f32 %v158, %v171
  %v187 = vmul.f32 %v163, %v171
  %v188 = vmul.f32 %v168, %v171
  %v189 = vld [vmem:[%s3] sm:$0xff]
  %v190 = vld [vmem:[%s3 + $0x8] sm:$0xff]
  %v191 = vld [vmem:[%s3 + $0x10] sm:$0xff]
  %v192 = vld [vmem:[%s3 + $0x18] sm:$0xff]
  %v193 = vld [vmem:[%s3 + $0x20] sm:$0xff]
  %v194 = vld [vmem:[%s3 + $0x28] sm:$0xff]
  %v195 = vld [vmem:[%s3 + $0x30] sm:$0xff]
  %v196 = vld [vmem:[%s3 + $0x38] sm:$0xff]
  %v197 = vld [vmem:[%s3 + $0x40] sm:$0xff]
  %v198 = vld [vmem:[%s3 + $0x48] sm:$0xff]
  %v199 = vld [vmem:[%s3 + $0x50] sm:$0xff]
  %v200 = vld [vmem:[%s3 + $0x58] sm:$0xff]
  %v201 = vld [vmem:[%s3 + $0x60] sm:$0xff]
  %v202 = vld [vmem:[%s3 + $0x68] sm:$0xff]
  %v203 = vld [vmem:[%s3 + $0x70] sm:$0xff]
  %v204 = vld [vmem:[%s3 + $0x78] sm:$0xff]
  %v205 = vmul.f32 %v41, %v41
  %207 = vset.pattern.permute.xlu0 0
  %208 = vperm.xlu0 %207, %v189
  %v209 = vpop.permute.xlu0 %208
  %212 = vset.pattern.permute.xlu0 0
  %213 = vperm.xlu0 %212, %v190
  %v214 = vpop.permute.xlu0 %213
  %217 = vset.pattern.permute.xlu0 0
  %218 = vperm.xlu0 %217, %v191
  %v219 = vpop.permute.xlu0 %218
  %222 = vset.pattern.permute.xlu0 0
  %223 = vperm.xlu0 %222, %v192
  %v224 = vpop.permute.xlu0 %223
  %227 = vset.pattern.permute.xlu0 0
  %228 = vperm.xlu0 %227, %v193
  %v229 = vpop.permute.xlu0 %228
  %232 = vset.pattern.permute.xlu0 0
  %233 = vperm.xlu0 %232, %v194
  %v234 = vpop.permute.xlu0 %233
  %237 = vset.pattern.permute.xlu0 0
  %238 = vperm.xlu0 %237, %v195
  %v239 = vpop.permute.xlu0 %238
  %242 = vset.pattern.permute.xlu0 0
  %243 = vperm.xlu0 %242, %v196
  %v244 = vpop.permute.xlu0 %243
  %247 = vset.pattern.permute.xlu0 0
  %248 = vperm.xlu0 %247, %v197
  %v249 = vpop.permute.xlu0 %248
  %252 = vset.pattern.permute.xlu0 0
  %253 = vperm.xlu0 %252, %v198
  %v254 = vpop.permute.xlu0 %253
  %257 = vset.pattern.permute.xlu0 0
  %258 = vperm.xlu0 %257, %v199
  %v259 = vpop.permute.xlu0 %258
  %262 = vset.pattern.permute.xlu0 0
  %263 = vperm.xlu0 %262, %v200
  %v264 = vpop.permute.xlu0 %263
  %267 = vset.pattern.permute.xlu0 0
  %268 = vperm.xlu0 %267, %v201
  %v269 = vpop.permute.xlu0 %268
  %272 = vset.pattern.permute.xlu0 0
  %273 = vperm.xlu0 %272, %v202
  %v274 = vpop.permute.xlu0 %273
  %277 = vset.pattern.permute.xlu0 0
  %278 = vperm.xlu0 %277, %v203
  %v279 = vpop.permute.xlu0 %278
  %282 = vset.pattern.permute.xlu0 0
  %283 = vperm.xlu0 %282, %v204
  %v284 = vpop.permute.xlu0 %283
  %v287 = vperm.slane %v205, 0
  %v289 = vmul.f32 %v209, %v287
  %v290 = vmul.f32 %v214, %v287
  %v291 = vmul.f32 %v219, %v287
  %v292 = vmul.f32 %v224, %v287
  %v293 = vmul.f32 %v229, %v287
  %v294 = vmul.f32 %v234, %v287
  %v295 = vmul.f32 %v239, %v287
  %v296 = vmul.f32 %v244, %v287
  %v297 = vmul.f32 %v249, %v287
  %v298 = vmul.f32 %v254, %v287
  %v299 = vmul.f32 %v259, %v287
  %v300 = vmul.f32 %v264, %v287
  %v301 = vmul.f32 %v269, %v287
  %v302 = vmul.f32 %v274, %v287
  %v303 = vmul.f32 %v279, %v287
  %v304 = vmul.f32 %v284, %v287
  %v305 = vmul.f32 %v289, %v171
  %v306 = vmul.f32 %v290, %v171
  %v307 = vmul.f32 %v291, %v171
  %v308 = vmul.f32 %v292, %v171
  %v309 = vmul.f32 %v293, %v171
  %v310 = vmul.f32 %v294, %v171
  %v311 = vmul.f32 %v295, %v171
  %v312 = vmul.f32 %v296, %v171
  %v313 = vmul.f32 %v297, %v171
  %v314 = vmul.f32 %v298, %v171
  %v315 = vmul.f32 %v299, %v171
  %v316 = vmul.f32 %v300, %v171
  %v317 = vmul.f32 %v301, %v171
  %v318 = vmul.f32 %v302, %v171
  %v319 = vmul.f32 %v303, %v171
  %v320 = vmul.f32 %v304, %v171
  %v321 = vsub.f32 %v173, %v305
  %v322 = vsub.f32 %v174, %v306
  %v323 = vsub.f32 %v175, %v307
  %v324 = vsub.f32 %v176, %v308
  %v325 = vsub.f32 %v177, %v309
  %v326 = vsub.f32 %v178, %v310
  %v327 = vsub.f32 %v179, %v311
  %v328 = vsub.f32 %v180, %v312
  %v329 = vsub.f32 %v181, %v313
  %v330 = vsub.f32 %v182, %v314
  %v331 = vsub.f32 %v183, %v315
  %v332 = vsub.f32 %v184, %v316
  %v333 = vsub.f32 %v185, %v317
  %v334 = vsub.f32 %v186, %v318
  %v335 = vsub.f32 %v187, %v319
  %v336 = vsub.f32 %v188, %v320
  %v337 = vmul.f32 %v321, 1.442695
  %v338 = vpow.pop %v337
  %v339 = vmul.f32 %v322, 1.442695
  %v340 = vpow.pop %v339
  %v341 = vmul.f32 %v323, 1.442695
  %v342 = vpow.pop %v341
  %v343 = vmul.f32 %v324, 1.442695
  %v344 = vpow.pop %v343
  %v345 = vmul.f32 %v325, 1.442695
  %v346 = vpow.pop %v345
  %v347 = vmul.f32 %v326, 1.442695
  %v348 = vpow.pop %v347
  %v349 = vmul.f32 %v327, 1.442695
  %v350 = vpow.pop %v349
  %v351 = vmul.f32 %v328, 1.442695
  %v352 = vpow.pop %v351
  %v353 = vmul.f32 %v329, 1.442695
  %v354 = vpow.pop %v353
  %v355 = vmul.f32 %v330, 1.442695
  %v356 = vpow.pop %v355
  %v357 = vmul.f32 %v331, 1.442695
  %v358 = vpow.pop %v357
  %v359 = vmul.f32 %v332, 1.442695
  %v360 = vpow.pop %v359
  %v361 = vmul.f32 %v333, 1.442695
  %v362 = vpow.pop %v361
  %v363 = vmul.f32 %v334, 1.442695
  %v364 = vpow.pop %v363
  %v365 = vmul.f32 %v335, 1.442695
  %v366 = vpow.pop %v365
  %v367 = vmul.f32 %v336, 1.442695
  %v368 = vpow.pop %v367
  %v369 = vmul.f32 %v338, 0.03
  %v370 = vmul.f32 %v340, 0.03
  %v371 = vmul.f32 %v342, 0.03
  %v372 = vmul.f32 %v344, 0.03
  %v373 = vmul.f32 %v346, 0.03
  %v374 = vmul.f32 %v348, 0.03
  %v375 = vmul.f32 %v350, 0.03
  %v376 = vmul.f32 %v352, 0.03
  %v377 = vmul.f32 %v354, 0.03
  %v378 = vmul.f32 %v356, 0.03
  %v379 = vmul.f32 %v358, 0.03
  %v380 = vmul.f32 %v360, 0.03
  %v381 = vmul.f32 %v362, 0.03
  %v382 = vmul.f32 %v364, 0.03
  %v383 = vmul.f32 %v366, 0.03
  %v384 = vmul.f32 %v368, 0.03
  %v385 = vlaneseq
  %v386 = vshrl.u32 %v385, 7
  %v387 = vadd.s32 %v386, 8
  %v388 = vadd.s32 %v386, 16
  %v389 = vadd.s32 %v386, 24
  %v390 = vadd.s32 %v386, 32
  %v391 = vadd.s32 %v386, 40
  %v392 = vadd.s32 %v386, 48
  %v393 = vadd.s32 %v386, 56
  %v394 = vadd.s32 %v386, 64
  %v395 = vadd.s32 %v386, 72
  %v396 = vadd.s32 %v386, 80
  %v397 = vadd.s32 %v386, 88
  %v398 = vadd.s32 %v386, 96
  %v399 = vadd.s32 %v386, 104
  %v400 = vadd.s32 %v386, 112
  %v401 = vadd.s32 %v386, 120
  %v402 = vlaneseq
  %v403 = vand.u32 %v402, 127
  %vm404 = vcmp.lt.s32.totalorder %v386, 36
  %vm405 = vcmp.lt.s32.totalorder %v387, 36
  %vm406 = vcmp.lt.s32.totalorder %v388, 36
  %vm407 = vcmp.lt.s32.totalorder %v389, 36
  %vm408 = vcmp.lt.s32.totalorder %v390, 36
  %vm409 = vcmp.lt.s32.totalorder %v391, 36
  %vm410 = vcmp.lt.s32.totalorder %v392, 36
  %vm411 = vcmp.lt.s32.totalorder %v393, 36
  %vm412 = vcmp.lt.s32.totalorder %v394, 36
  %vm413 = vcmp.lt.s32.totalorder %v395, 36
  %vm414 = vcmp.lt.s32.totalorder %v396, 36
  %vm415 = vcmp.lt.s32.totalorder %v397, 36
  %vm416 = vcmp.lt.s32.totalorder %v398, 36
  %vm417 = vcmp.lt.s32.totalorder %v399, 36
  %vm418 = vcmp.lt.s32.totalorder %v400, 36
  %vm419 = vcmp.lt.s32.totalorder %v401, 36
  %vm420 = vcmp.lt.s32.totalorder %v403, 8
  %vm421 = vmand %vm404, %vm420
  %vm422 = vmand %vm405, %vm420
  %vm423 = vmand %vm406, %vm420
  %vm424 = vmand %vm407, %vm420
  %vm425 = vmand %vm408, %vm420
  %vm426 = vmand %vm409, %vm420
  %vm427 = vmand %vm410, %vm420
  %vm428 = vmand %vm411, %vm420
  %vm429 = vmand %vm412, %vm420
  %vm430 = vmand %vm413, %vm420
  %vm431 = vmand %vm414, %vm420
  %vm432 = vmand %vm415, %vm420
  %vm433 = vmand %vm416, %vm420
  %vm434 = vmand %vm417, %vm420
  %vm435 = vmand %vm418, %vm420
  %vm436 = vmand %vm419, %vm420
  %v437 = vsel %vm421, %v369, 0.0
  %v438 = vsel %vm422, %v370, 0.0
  %v439 = vsel %vm423, %v371, 0.0
  %v440 = vsel %vm424, %v372, 0.0
  %v441 = vsel %vm425, %v373, 0.0
  %v442 = vsel %vm426, %v374, 0.0
  %v443 = vsel %vm427, %v375, 0.0
  %v444 = vsel %vm428, %v376, 0.0
  %v445 = vsel %vm429, %v377, 0.0
  %v446 = vsel %vm430, %v378, 0.0
  %v447 = vsel %vm431, %v379, 0.0
  %v448 = vsel %vm432, %v380, 0.0
  %v449 = vsel %vm433, %v381, 0.0
  %v450 = vsel %vm434, %v382, 0.0
  %v451 = vsel %vm435, %v383, 0.0
  %v452 = vsel %vm436, %v384, 0.0
  %453 = vst [vmem:[%s4] sm:$0xff] %v437
  %454 = vst [vmem:[%s4 + $0x8] sm:$0xff] %v438
  %455 = vst [vmem:[%s4 + $0x10] sm:$0xff] %v439
  %456 = vst [vmem:[%s4 + $0x18] sm:$0xff] %v440
  %457 = vst [vmem:[%s4 + $0x20] sm:$0xff] %v441
  %458 = vst [vmem:[%s4 + $0x28] sm:$0xff] %v442
  %459 = vst [vmem:[%s4 + $0x30] sm:$0xff] %v443
  %460 = vst [vmem:[%s4 + $0x38] sm:$0xff] %v444
  %461 = vst [vmem:[%s4 + $0x40] sm:$0xff] %v445
  %462 = vst [vmem:[%s4 + $0x48] sm:$0xff] %v446
  %463 = vst [vmem:[%s4 + $0x50] sm:$0xff] %v447
  %464 = vst [vmem:[%s4 + $0x58] sm:$0xff] %v448
  %465 = vst [vmem:[%s4 + $0x60] sm:$0xff] %v449
  %466 = vst [vmem:[%s4 + $0x68] sm:$0xff] %v450
  %467 = vst [vmem:[%s4 + $0x70] sm:$0xff] %v451
  %468 = vst [vmem:[%s4 + $0x78] sm:$0xff] %v452
  // Predicated region
  $region18: #{my_conv2d_forward.2} parent=0 // pred_check
    _
  $region19: #{my_conv2d_forward.2} parent=0 // pred_check_branch
    %470 = sbr.rel (0) target = $region21
  $region20: #{my_conv2d_forward.2} parent=0 // pred_region
    _
  $region21: #{my_conv2d_forward.2} parent=0 // pred_fallthru
    _
  // Predicated region
  $region22: #{my_conv2d_forward.2} parent=0 // pred_check
    _
  $region23: #{my_conv2d_forward.2} parent=0 // pred_check_branch
    %472 = sbr.rel (0) target = $region25
  $region24: #{my_conv2d_forward.2} parent=0 // pred_region
    _
  $region25: #{my_conv2d_forward.2} parent=0 // pred_fallthru
    _

</llo_original>
